<compile_context>
chip_gen: v7x
topology: tpu7x:2x2x1
jax: 0.10.0
libtpu: 0.0.40
codegen_flags: <defaults>
</compile_context>

<pallas_src>
import jax
import jax.numpy as jnp
from jax.experimental import pallas as pl
from jax.experimental.pallas import tpu as pltpu


def _pick_batch_block(n, max_blk=8):
    """Largest divisor of n that is <= max_blk while keeping >=2 grid steps
    when possible (so v7x's second TensorCore is not idle)."""
    target = min(max_blk, max(1, n // 2))
    for b in range(target, 0, -1):
        if n % b == 0:
            return b
    return 1


def _make_conv1d_kernel(B_blk, L, K, C_in, C_out, pad):
    def conv1d_kernel(x_ref, w_ref, b_ref, o_ref):
        # x_ref: (B_blk, C_in, L)     input tile, NCL layout (L on lanes)
        # w_ref: (C_out, K*C_in)      im2col-folded weights
        # b_ref: (C_out, 1)           bias (broadcasts across lanes)
        # o_ref: (B_blk, C_out, L)    output tile, NCL layout
        x = x_ref[...]
        w = w_ref[...]
        bias = b_ref[...]

        # "same" zero padding along L, done on the VMEM tile (no HBM pass).
        if pad > 0:
            zeros = jnp.zeros((B_blk, C_in, pad), x.dtype)
            x_pad = jnp.concatenate([zeros, x, zeros], axis=-1)  # (B, C_in, L+K-1)
        else:
            x_pad = x

        # One im2col matmul per batch element (static, unrolled loop).
        for b in range(B_blk):
            x_win = jnp.concatenate(
                [x_pad[b, :, k:k + L] for k in range(K)], axis=0
            )  # (K*C_in, L)
            acc = jnp.dot(w, x_win, preferred_element_type=jnp.float32)  # (C_out, L)
            o_ref[b] = (acc + bias).astype(o_ref.dtype)

    return conv1d_kernel


def var_conv_forward(x_ncl, weight_oik, bias_o, kernel_size=7):
    """Conv1d with padding=(kernel_size-1)//2, matching nn.Conv1d semantics.

    Args:
      x_ncl:      (N, C_in, L)       float32 (PyTorch NCL layout)
      weight_oik: (C_out, C_in, K)   float32 (PyTorch layout)
      bias_o:     (C_out,)           float32
    Returns:
      (N, C_out, L) float32
    """
    N, C_in, L = x_ncl.shape
    C_out, C_in_w, K = weight_oik.shape
    assert K == kernel_size and C_in_w == C_in
    # padding=(K-1)//2 only gives "same" length for odd K (matches the module).
    assert K % 2 == 1, "VARConv 'same' padding math assumes odd kernel_size"
    pad = (K - 1) // 2

    # Fold weights for im2col: W_folded[o, k*C_in + c] = weight[o, c, k].
    # Tiny arrays; done once outside the kernel.
    w_folded = jnp.transpose(weight_oik, (0, 2, 1)).reshape(C_out, K * C_in)
    b_col = bias_o.reshape(C_out, 1)

    B_blk = _pick_batch_block(N)
    grid = (N // B_blk,)

    dtype_bytes = jnp.dtype(x_ncl.dtype).itemsize
    in_blk = B_blk * C_in * L * dtype_bytes
    out_blk = B_blk * C_out * L * dtype_bytes
    w_bytes = C_out * K * C_in * dtype_bytes
    b_bytes = C_out * dtype_bytes
    # in-kernel padded copy + im2col windows (f32 working set)
    work = B_blk * (K + 1) * C_in * (L + K) * 4
    vmem_limit = int(
        min(max(2 * (2 * (in_blk + out_blk) + w_bytes + b_bytes + work),
                16 * 2**20),
            64 * 2**20)
    )

    cost = pl.CostEstimate(
        flops=2 * N * L * K * C_in * C_out,
        transcendentals=0,
        bytes_accessed=(x_ncl.size + w_folded.size + bias_o.size
                        + N * C_out * L) * dtype_bytes,
    )

    kernel = _make_conv1d_kernel(B_blk, L, K, C_in, C_out, pad)

    out = pl.pallas_call(
        kernel,
        out_shape=jax.ShapeDtypeStruct((N, C_out, L), x_ncl.dtype),
        grid_spec=pltpu.PrefetchScalarGridSpec(
            num_scalar_prefetch=0,
            grid=grid,
            in_specs=[
                pl.BlockSpec((B_blk, C_in, L), lambda i: (i, 0, 0)),
                pl.BlockSpec((C_out, K * C_in), lambda i: (0, 0)),
                pl.BlockSpec((C_out, 1), lambda i: (0, 0)),
            ],
            out_specs=pl.BlockSpec((B_blk, C_out, L), lambda i: (i, 0, 0)),
        ),
        compiler_params=pltpu.CompilerParams(
            dimension_semantics=("parallel",),
            vmem_limit_bytes=vmem_limit,
        ),
        cost_estimate=cost,
    )(x_ncl, w_folded, b_col)

    return out


if __name__ == "__main__":
    # Small shapes consistent with VARConv(in_channels=4, out_channels=8).
    N, C_in, C_out, L, K = 2, 4, 8, 16, 7

    key = jax.random.PRNGKey(0)
    kx, kw, kb = jax.random.split(key, 3)

    x = jax.random.normal(kx, (N, C_in, L), dtype=jnp.float32)

    # Deterministic init mimicking nn.Conv1d default (uniform +/- 1/sqrt(fan_in)).
    bound = 1.0 / jnp.sqrt(jnp.float32(C_in * K))
    weight = jax.random.uniform(
        kw, (C_out, C_in, K), minval=-bound, maxval=bound, dtype=jnp.float32
    )
    bias = jax.random.uniform(
        kb, (C_out,), minval=-bound, maxval=bound, dtype=jnp.float32
    )

    out = var_conv_forward(x, weight, bias, kernel_size=K)
    out = jax.block_until_ready(out)

    # Independent reference via lax conv (same semantics as nn.Conv1d).
    ref = jax.lax.conv_general_dilated(
        x, weight,
        window_strides=(1,),
        padding=[((K - 1) // 2, (K - 1) // 2)],
        dimension_numbers=("NCH", "OIH", "NCH"),
    ) + bias[None, :, None]

    assert out.shape == (N, C_out, L)
    assert jnp.allclose(out, ref, atol=1e-5, rtol=1e-5)
    print("KERNEL_OK")
</pallas_src>

<mosaic_0001>
module attributes {stable_mosaic.version = 11 : i64} {
  func.func @conv1d_kernel(%arg0: i32, %arg1: memref<1x4x16xf32, #tpu.memory_space<vmem>>, %arg2: memref<8x28xf32, #tpu.memory_space<vmem>>, %arg3: memref<8x1xf32, #tpu.memory_space<vmem>>, %arg4: memref<1x8x16xf32, #tpu.memory_space<vmem>>) attributes {dimension_semantics = [#tpu.dimension_semantics<parallel>], iteration_bounds = array<i64: 2>, scalar_prefetch = 0 : i64, scratch_operands = 0 : i64, tpu.core_type = #tpu.core_type<tc>, window_params = [{transform_indices = @transform_0, window_bounds = array<i64: 1, 4, 16>}, {pipeline_mode = #tpu.pipeline_mode<synchronous>, transform_indices = @transform_1, window_bounds = array<i64: 8, 28>}, {pipeline_mode = #tpu.pipeline_mode<synchronous>, transform_indices = @transform_2, window_bounds = array<i64: 8, 1>}, {transform_indices = @transform_3, window_bounds = array<i64: 1, 8, 16>}]} {
    %c0 = arith.constant 0 : index
    %c0_0 = arith.constant 0 : index
    %c0_1 = arith.constant 0 : index
    %0 = vector.load %arg1[%c0, %c0_0, %c0_1] : memref<1x4x16xf32, #tpu.memory_space<vmem>>, vector<1x4x16xf32>
    %c0_2 = arith.constant 0 : index
    %c0_3 = arith.constant 0 : index
    %1 = vector.load %arg2[%c0_2, %c0_3] : memref<8x28xf32, #tpu.memory_space<vmem>>, vector<8x28xf32>
    %c0_4 = arith.constant 0 : index
    %c0_5 = arith.constant 0 : index
    %2 = vector.load %arg3[%c0_4, %c0_5] : memref<8x1xf32, #tpu.memory_space<vmem>>, vector<8x1xf32>
    %cst = arith.constant 0.000000e+00 : f32
    %3 = vector.broadcast %cst : f32 to vector<1x4x3xf32>
    %4 = tpu.concatenate %3, %0, %3 in 2 : vector<1x4x3xf32>, vector<1x4x16xf32>, vector<1x4x3xf32> -> vector<1x4x22xf32>
    %5 = vector.extract_strided_slice %4 {offsets = [0, 0, 0], sizes = [1, 4, 16], strides = [1, 1, 1]} : vector<1x4x22xf32> to vector<1x4x16xf32>
    %6 = vector.shape_cast %5 : vector<1x4x16xf32> to vector<4x16xf32>
    %7 = vector.extract_strided_slice %4 {offsets = [0, 0, 1], sizes = [1, 4, 16], strides = [1, 1, 1]} : vector<1x4x22xf32> to vector<1x4x16xf32>
    %8 = vector.shape_cast %7 : vector<1x4x16xf32> to vector<4x16xf32>
    %9 = vector.extract_strided_slice %4 {offsets = [0, 0, 2], sizes = [1, 4, 16], strides = [1, 1, 1]} : vector<1x4x22xf32> to vector<1x4x16xf32>
    %10 = vector.shape_cast %9 : vector<1x4x16xf32> to vector<4x16xf32>
    %11 = vector.extract_strided_slice %4 {offsets = [0, 0, 3], sizes = [1, 4, 16], strides = [1, 1, 1]} : vector<1x4x22xf32> to vector<1x4x16xf32>
    %12 = vector.shape_cast %11 : vector<1x4x16xf32> to vector<4x16xf32>
    %13 = vector.extract_strided_slice %4 {offsets = [0, 0, 4], sizes = [1, 4, 16], strides = [1, 1, 1]} : vector<1x4x22xf32> to vector<1x4x16xf32>
    %14 = vector.shape_cast %13 : vector<1x4x16xf32> to vector<4x16xf32>
    %15 = vector.extract_strided_slice %4 {offsets = [0, 0, 5], sizes = [1, 4, 16], strides = [1, 1, 1]} : vector<1x4x22xf32> to vector<1x4x16xf32>
    %16 = vector.shape_cast %15 : vector<1x4x16xf32> to vector<4x16xf32>
    %17 = vector.extract_strided_slice %4 {offsets = [0, 0, 6], sizes = [1, 4, 16], strides = [1, 1, 1]} : vector<1x4x22xf32> to vector<1x4x16xf32>
    %18 = vector.shape_cast %17 : vector<1x4x16xf32> to vector<4x16xf32>
    %19 = tpu.concatenate %6, %8, %10, %12, %14, %16, %18 in 0 : vector<4x16xf32>, vector<4x16xf32>, vector<4x16xf32>, vector<4x16xf32>, vector<4x16xf32>, vector<4x16xf32>, vector<4x16xf32> -> vector<28x16xf32>
    %cst_6 = arith.constant dense<0.000000e+00> : vector<8x16xf32>
    %20 = tpu.matmul %1, %19, %cst_6 {dimension_numbers = #tpu.dot_dimension_numbers<[1], [0], [0], [1], [0, 0, 1, 1], [], []>} : vector<8x28xf32>, vector<28x16xf32>, vector<8x16xf32> -> vector<8x16xf32>
    %21 = vector.broadcast %2 : vector<8x1xf32> to vector<8x16xf32>
    %22 = arith.addf %20, %21 : vector<8x16xf32>
    %c0_7 = arith.constant 0 : index
    %c0_8 = arith.constant 0 : index
    %c0_9 = arith.constant 0 : index
    %23 = vector.load %arg4[%c0_7, %c0_8, %c0_9] : memref<1x8x16xf32, #tpu.memory_space<vmem>>, vector<1x8x16xf32>
    %24 = vector.shape_cast %23 : vector<1x8x16xf32> to vector<8x16xf32>
    %25 = vector.shape_cast %22 : vector<8x16xf32> to vector<1x8x16xf32>
    tpu.vector_store %arg4[%c0_7, %c0_8, %c0_9], %25 {strides = array<i32>} : memref<1x8x16xf32, #tpu.memory_space<vmem>>, vector<1x8x16xf32>,
    return
  }
  func.func @transform_0(%arg0: i32) -> (i32, i32, i32) {
    %c0_i32 = arith.constant 0 : i32
    %c0_i32_0 = arith.constant 0 : i32
    %c0_i32_1 = arith.constant 0 : i32
    return %arg0, %c0_i32, %c0_i32_0 : i32, i32, i32
  }
  func.func @transform_1(%arg0: i32) -> (i32, i32) {
    %c0_i32 = arith.constant 0 : i32
    %c0_i32_0 = arith.constant 0 : i32
    %c0_i32_1 = arith.constant 0 : i32
    return %c0_i32, %c0_i32_0 : i32, i32
  }
  func.func @transform_2(%arg0: i32) -> (i32, i32) {
    %c0_i32 = arith.constant 0 : i32
    %c0_i32_0 = arith.constant 0 : i32
    %c0_i32_1 = arith.constant 0 : i32
    return %c0_i32, %c0_i32_0 : i32, i32
  }
  func.func @transform_3(%arg0: i32) -> (i32, i32, i32) {
    %c0_i32 = arith.constant 0 : i32
    %c0_i32_0 = arith.constant 0 : i32
    %c0_i32_1 = arith.constant 0 : i32
    return %arg0, %c0_i32, %c0_i32_0 : i32, i32, i32
  }
}

</mosaic_0001>

<llo_original>
// kernel: tpu_custom_call.1
$region0: #{tpu_custom_call.1}
  #allocation0 [shape = 'u32[]', space=smem, size = 0x4, offset = 0x4, fixed_abs, tag = 'smem constant byte address 0x4 - core index']
  #allocation1 [shape = 'u32[144,128]{1,0:T(1,128)}', space=vmem, size = 0x12000, scoped, tag = 'internal scratch']
  %s0 = inlined_call_operand.vmem [shape: f32[2,4,16], index: 0, kind: input, shape index: {}]
  %s1 = inlined_call_operand.hbm [shape: f32[8,28], index: 1, kind: input, shape index: {}]
  %s2 = inlined_call_operand.vmem [shape: f32[8,1], index: 2, kind: input, shape index: {}]
  %s3 = inlined_call_operand.hbm [shape: f32[2,8,16], index: 3, kind: output, shape index: {}]
  %s4 = sld [smem:[#allocation0]]
  $region49: #{tpu_custom_call.1} parent=0
    _
  %s6 = ssub.s32 1, %s4
  %s7 = scalar_select 0, %s6, %s4
  $region1: #{tpu_custom_call.1} parent=0
    #allocation2 [shape = 'u8[4096]{0}', space=vmem, size = 0x1000, scoped, tag = 'input window, operand 1, single buffered']
    #allocation3 [shape = 's32[2]{0}', space=sflag, size = 0x8, scoped, tag = 'scoped memory for tpu_custom_call.1']
    #allocation4 [shape = 's32[2]{0}', space=sflag, size = 0x8, scoped, tag = 'scoped memory for tpu_custom_call.1']
    #allocation5 [shape = 'u8[8192]{0}', space=vmem, size = 0x2000, scoped, tag = 'output window, operand 0']
    %8 = vsyncpa [#allocation3], 0
    %9 = vsyncpa [#allocation4], 0
    %s10 = scalar_lea.sflag [#allocation4], 1
    %11 = vsyncpa %s10, 0
    loop: start=0, step=1, limit=4
    $region2: #{tpu_custom_call.1} parent=1 // loop_pre_header
      _
    $region3: #{tpu_custom_call.1} parent=1 // loop_header
      %s13 = sphi 0, %s17
      %p14 = scmp.ge.s32.totalorder %s13, 4
      %s23 = sphi 0, %s25
      %s26 = sphi 0, %s23
      %s27 = sphi 0, %s26
      %s43 = sphi 0, %s27
      %s47 = sphi 0, %s47
      %s49 = sphi 0, %s47
      %s50 = sphi 0, %s49
      %s64 = sphi 0, %s50
      %s68 = sphi 0, %s68
      %s70 = sphi 0, %s68
      %s71 = sphi 0, %s70
      %s85 = sphi 0, %s71
      %s91 = sphi 0, %s93
      %s94 = sphi 0, %s91
      %s95 = sphi 0, %s94
      %s111 = sphi 0, %s95
    $region4: #{tpu_custom_call.1} parent=1 // loop_header_branch
      %16 = sbr.rel (%p14) target = $region8
    $region5: #{tpu_custom_call.1} parent=1 // loop_body
      %s18 = ssub.s32 %s13, 1
      %s19 = ssub.s32 %s13, 2
      %s20 = sadd.s32 %s13, 1
      %s21 = ssub.s32 %s13, %s20
      %p22 = scmp.eq.s32.totalorder %s21, 0
      %s24 = sadd.s32 %s23, 1
      %s25 = scalar_select %p22, %s23, %s24
      %p28 = pneg %p22
      %p29 = scmp.eq.s32.totalorder %s13, 1
      %p30 = por %p28, %p29
      %p31 = scmp.ne.s32.totalorder %s23, %s26
      %p32 = scmp.eq.s32.totalorder %s13, 0
      %p33 = por %p31, %p32
      %p34 = scmp.ne.s32.totalorder %s23, %s26
      %p35 = scmp.eq.s32.totalorder %s18, 1
      %p36 = por %p34, %p35
      %p37 = scmp.ne.s32.totalorder %s26, %s27
      %p38 = scmp.eq.s32.totalorder %s18, 0
      %p39 = por %p37, %p38
      %p40 = scmp.ne.s32.totalorder %s26, %s27
      %p41 = scmp.eq.s32.totalorder %s19, 1
      %p42 = por %p40, %p41
      %p44 = scmp.ne.s32.totalorder %s27, %s43
      %p45 = scmp.eq.s32.totalorder %s19, 0
      %p46 = por %p44, %p45
      %s48 = sadd.s32 %s47, 1
      %p51 = scmp.eq.s32.totalorder %s13, 1
      %p52 = scmp.ne.s32.totalorder %s47, %s49
      %p53 = scmp.eq.s32.totalorder %s13, 0
      %p54 = por %p52, %p53
      %p55 = scmp.ne.s32.totalorder %s47, %s49
      %p56 = scmp.eq.s32.totalorder %s18, 1
      %p57 = por %p55, %p56
      %p58 = scmp.ne.s32.totalorder %s49, %s50
      %p59 = scmp.eq.s32.totalorder %s18, 0
      %p60 = por %p58, %p59
      %p61 = scmp.ne.s32.totalorder %s49, %s50
      %p62 = scmp.eq.s32.totalorder %s19, 1
      %p63 = por %p61, %p62
      %p65 = scmp.ne.s32.totalorder %s50, %s64
      %p66 = scmp.eq.s32.totalorder %s19, 0
      %p67 = por %p65, %p66
      %s69 = sadd.s32 %s68, 1
      %p72 = scmp.eq.s32.totalorder %s13, 1
      %p73 = scmp.ne.s32.totalorder %s68, %s70
      %p74 = scmp.eq.s32.totalorder %s13, 0
      %p75 = por %p73, %p74
      %p76 = scmp.ne.s32.totalorder %s68, %s70
      %p77 = scmp.eq.s32.totalorder %s18, 1
      %p78 = por %p76, %p77
      %p79 = scmp.ne.s32.totalorder %s70, %s71
      %p80 = scmp.eq.s32.totalorder %s18, 0
      %p81 = por %p79, %p80
      %p82 = scmp.ne.s32.totalorder %s70, %s71
      %p83 = scmp.eq.s32.totalorder %s19, 1
      %p84 = por %p82, %p83
      %p86 = scmp.ne.s32.totalorder %s71, %s85
      %p87 = scmp.eq.s32.totalorder %s19, 0
      %p88 = por %p86, %p87
      %s89 = ssub.s32 %s13, %s20
      %p90 = scmp.eq.s32.totalorder %s89, 0
      %s92 = sadd.s32 %s91, 1
      %s93 = scalar_select %p90, %s91, %s92
      %p96 = pneg %p90
      %p97 = scmp.eq.s32.totalorder %s13, 1
      %p98 = por %p96, %p97
      %p99 = scmp.ne.s32.totalorder %s91, %s94
      %p100 = scmp.eq.s32.totalorder %s13, 0
      %p101 = por %p99, %p100
      %p102 = scmp.ne.s32.totalorder %s91, %s94
      %p103 = scmp.eq.s32.totalorder %s18, 1
      %p104 = por %p102, %p103
      %p105 = scmp.ne.s32.totalorder %s94, %s95
      %p106 = scmp.eq.s32.totalorder %s18, 0
      %p107 = por %p105, %p106
      %p108 = scmp.ne.s32.totalorder %s94, %s95
      %p109 = scmp.eq.s32.totalorder %s19, 1
      %p110 = por %p108, %p109
      %p112 = scmp.ne.s32.totalorder %s95, %s111
      %p113 = scmp.eq.s32.totalorder %s19, 0
      %p114 = por %p112, %p113
      %p115 = scmp.le.s32.totalorder 1, %s13
      %p116 = scmp.lt.s32.totalorder %s13, 3
      %p117 = pnand %p115, %p116
      %p118 = pneg %p117
      // Predicated region
      $region9: #{tpu_custom_call.1} parent=5 // pred_check
        _
      $region10: #{tpu_custom_call.1} parent=5 // pred_check_branch
        %120 = sbr.rel (%p117) target = $region12
      $region11: #{tpu_custom_call.1} parent=5 // pred_region
        %s121 = ssub.s32 %s13, 1
        // Predicated region
        $region13: #{tpu_custom_call.1} parent=11 // pred_check
          %p122 = pneg %p60
        $region14: #{tpu_custom_call.1} parent=11 // pred_check_branch
          %124 = sbr.rel (%p122) target = $region16
        $region15: #{tpu_custom_call.1} parent=11 // pred_region
          %s126 = ssub.s32 128, 128
          %127 = vsyncadd [#allocation3], %s126
          %s129 = sshll.u32 [#allocation2], 4
          %s130 = int_to_ptr.vmem [resolvable:$true] %s129
          %132 = dma.hbm_to_vmem [thread:$0]  %s1, 128, %s130, [#allocation3]
        $region16: #{tpu_custom_call.1} parent=11 // pred_fallthru
          _
        // Predicated region
        $region17: #{tpu_custom_call.1} parent=11 // pred_check
          %p133 = pneg %p81
        $region18: #{tpu_custom_call.1} parent=11 // pred_check_branch
          %135 = sbr.rel (%p133) target = $region20
        $region19: #{tpu_custom_call.1} parent=11 // pred_region
          _
        $region20: #{tpu_custom_call.1} parent=11 // pred_fallthru
          _
      $region12: #{tpu_custom_call.1} parent=5 // pred_fallthru
        _
      %p136 = scmp.lt.s32.totalorder %s13, 2
      // Predicated region
      $region21: #{tpu_custom_call.1} parent=5 // pred_check
        %p137 = pneg %p136
      $region22: #{tpu_custom_call.1} parent=5 // pred_check_branch
        %139 = sbr.rel (%p137) target = $region24
      $region23: #{tpu_custom_call.1} parent=5 // pred_region
        // Predicated region
        $region25: #{tpu_custom_call.1} parent=23 // pred_check
          %p140 = pneg %p33
        $region26: #{tpu_custom_call.1} parent=23 // pred_check_branch
          %142 = sbr.rel (%p140) target = $region28
        $region27: #{tpu_custom_call.1} parent=23 // pred_region
          %p143 = scmp.lt.s32.totalorder %s13, 1
          %s144 = scalar_select %p143, %s13, 1
          %s145 = smul.addr %s144, 4
          %s146 = scalar_lea.vmem %s0, %s145
        $region28: #{tpu_custom_call.1} parent=23 // pred_fallthru
          _
      $region24: #{tpu_custom_call.1} parent=5 // pred_fallthru
        _
      %p147 = scmp.le.s32.totalorder 1, %s13
      %p148 = scmp.lt.s32.totalorder %s13, 3
      %p149 = pnand %p147, %p148
      %p150 = pneg %p149
      // Predicated region
      $region29: #{tpu_custom_call.1} parent=5 // pred_check
        _
      $region30: #{tpu_custom_call.1} parent=5 // pred_check_branch
        %152 = sbr.rel (%p149) target = $region32
      $region31: #{tpu_custom_call.1} parent=5 // pred_region
        %s153 = ssub.s32 %s13, 1
        // Predicated region
        $region33: #{tpu_custom_call.1} parent=31 // pred_check
          %p154 = pneg %p60
        $region34: #{tpu_custom_call.1} parent=31 // pred_check_branch
          %156 = sbr.rel (%p154) target = $region36
        $region35: #{tpu_custom_call.1} parent=31 // pred_region
          %157 = dma.done [#allocation3], 128
        $region36: #{tpu_custom_call.1} parent=31 // pred_fallthru
          _
        %p158 = scmp.lt.s32.totalorder %s18, 1
        %s159 = scalar_select %p158, %s18, 1
        %s160 = smul.addr %s159, 4
        %s161 = scalar_lea.vmem %s0, %s160
        %p162 = pneg %p39
        %p163 = pneg %p36
        %p164 = pneg %p60
        %p165 = pneg %p57
        %p166 = pneg %p81
        %p167 = pneg %p78
        %p168 = pneg %p107
        %p169 = pneg %p104
        %s170 = sand.u32 %s94, 1
        %s171 = scalar_lea.sflag [#allocation4], %s170
        %s172 = sand.u32 %s94, 1
        %s173 = smul.addr %s172, 8
        %s174 = scalar_lea.vmem [#allocation5], %s173
        %p175 = scmp.lt.s32.totalorder %s18, 1
        %s176 = scalar_select %p175, %s18, 1
        %s177 = smul.addr %s176, 4
        %s178 = scalar_lea.vmem %s0, %s177
        %v179 = vld [vmem:[%s178] sm:$0xf]
        %v180 = vld [vmem:[#allocation2] sm:$0xff]
        %v181 = vld [vmem:[%s2] sm:$0xff]
        %183 = vrot.lane.b32.xlu0 %v179, 3
        %v184 = vpop.permute.xlu0 %183
        %vm186 = vcmask 23552
        %v187 = vsel %vm186, 0.0, %v184
        %vm188 = vcmask 154624
        %v189 = vsel %vm188, %v187, 0.0
        %v191 = vrot.slane %v189, 4
        %192 = vrot.lane.b32.xlu0 %v191, 127
        %v193 = vpop.permute.xlu0 %192
        %195 = vrot.lane.b32.xlu0 %v189, 126
        %v196 = vpop.permute.xlu0 %195
        %198 = vrot.lane.b32.xlu0 %v191, 125
        %v199 = vpop.permute.xlu0 %198
        %201 = vrot.lane.b32.xlu0 %v189, 124
        %v202 = vpop.permute.xlu0 %201
        %204 = vrot.lane.b32.xlu0 %v191, 123
        %v205 = vpop.permute.xlu0 %204
        %207 = vrot.lane.b32.xlu0 %v189, 122
        %v208 = vpop.permute.xlu0 %207
        %vm209 = vcmask 1043456
        %v210 = vsel %vm209, %v189, %v193
        %v211 = vsel %vm209, %v196, %v199
        %v212 = vsel %vm209, %v202, %v205
        %214 = vset.pattern.permute.xlu0 0
        %215 = vperm.xlu0 %214, %v181
        %v216 = vpop.permute.xlu0 %215
        %vm218 = vcmask 228352
        %v220 = vsel %vm218, %v180, 0
        %v222 = vsel %vm209, %v208, 0
        %224 = vmatprep.subr.mxu0 0.0
        %225 = vmatpush1.msra.mxu0 %v210
        %226 = vmatprep.subr.mxu0 0.0
        %227 = vmatpush1.msra.mxu0 %v211
        %228 = vmatprep.subr.mxu0 0.0
        %229 = vmatpush1.msra.mxu0 %v212
        %230 = vmatprep.subr.mxu0 0.0
        %231 = vmatpush1.msra.mxu0 %v222
        %232 = vmatprep.subr.mxu0 0.0
        %233 = vmatpush1.msra.mxu0 0.0
        %234 = vmatprep.subr.mxu0 0.0
        %235 = vmatpush1.msra.mxu0 0.0
        %236 = vmatprep.subr.mxu0 0.0
        %237 = vmatpush1.msra.mxu0 0.0
        %238 = vmatprep.subr.mxu0 0.0
        %239 = vmatpush1.msra.mxu0 0.0
        %240 = vmatprep.subr.mxu0 0.0
        %241 = vmatpush1.msra.mxu0 0.0
        %242 = vmatprep.subr.mxu0 0.0
        %243 = vmatpush1.msra.mxu0 0.0
        %244 = vmatprep.subr.mxu0 0.0
        %245 = vmatpush1.msra.mxu0 0.0
        %246 = vmatprep.subr.mxu0 0.0
        %247 = vmatpush1.msra.mxu0 0.0
        %248 = vmatprep.subr.mxu0 0.0
        %249 = vmatpush1.msra.mxu0 0.0
        %250 = vmatprep.subr.mxu0 0.0
        %251 = vmatpush1.msra.mxu0 0.0
        %252 = vmatprep.subr.mxu0 0.0
        %253 = vmatpush1.msra.mxu0 0.0
        %254 = vmatprep.subr.mxu0 0.0
        %255 = vmatpush1.msra.mxu0 0.0
        %256 = vmatprep.subr.mxu0 0.0
        %257 = vmatpush1.msra.mxu0 0.0
        %258 = vmatprep.subr.mxu0 0.0
        %259 = vmatpush1.msra.mxu0 0.0
        %260 = vmatprep.subr.mxu0 0.0
        %261 = vmatpush1.msra.mxu0 0.0
        %262 = vmatprep.subr.mxu0 0.0
        %263 = vmatpush1.msra.mxu0 0.0
        %264 = vmatprep.subr.mxu0 0.0
        %265 = vmatpush1.msra.mxu0 0.0
        %266 = vmatprep.subr.mxu0 0.0
        %267 = vmatpush1.msra.mxu0 0.0
        %268 = vmatprep.subr.mxu0 0.0
        %269 = vmatpush1.msra.mxu0 0.0
        %270 = vmatprep.subr.mxu0 0.0
        %271 = vmatpush1.msra.mxu0 0.0
        %272 = vmatprep.subr.mxu0 0.0
        %273 = vmatpush1.msra.mxu0 0.0
        %274 = vmatprep.subr.mxu0 0.0
        %275 = vmatpush1.msra.mxu0 0.0
        %276 = vmatprep.subr.mxu0 0.0
        %277 = vmatpush1.msra.mxu0 0.0
        %278 = vmatprep.subr.mxu0 0.0
        %279 = vmatpush1.msra.mxu0 0.0
        %280 = vmatprep.subr.mxu0 0.0
        %281 = vmatpush1.msra.mxu0 0.0
        %282 = vmatprep.subr.mxu0 0.0
        %283 = vmatpush1.msra.mxu0 0.0
        %284 = vmatprep.subr.mxu0 0.0
        %285 = vmatpush1.msra.mxu0 0.0
        %286 = vmatprep.subr.mxu0 0.0
        %287 = vmatpush1.msra.mxu0 0.0
        %288 = vmatprep.mubr.f32.mxu0 0.0
        %289 = vmatmul.mubr.f32.gmra.mrb[0].mxu0 %v220
        %v290 = vpop.f32.mrb[0].mxu0
        %v291 = vadd.f32 %v216, %v290
        %v292 = vpop.f32.mrb[0].mxu0
        %293 = vdwg.mxu0
        %vm294 = vcmask 130048
        %295 = vst.msk [vmem:[%s174] sm:$0xff] %vm294, %v291
        %s296 = sand.u32 %s94, 1
        %s297 = scalar_lea.sflag [#allocation4], %s296
        %s298 = sand.u32 %s94, 1
        %s299 = smul.addr %s298, 8
        %s300 = scalar_lea.vmem [#allocation5], %s299
        // Predicated region
        $region37: #{tpu_custom_call.1} parent=31 // pred_check
          %p301 = pneg %p104
        $region38: #{tpu_custom_call.1} parent=31 // pred_check_branch
          %303 = sbr.rel (%p301) target = $region40
        $region39: #{tpu_custom_call.1} parent=31 // pred_region
          %s305 = ssub.s32 128, 128
          %306 = vsyncadd %s297, %s305
          %s307 = smul.addr %s18, 128
          %s308 = scalar_lea.hbm %s3, %s307
          %s310 = sshll.u32 %s300, 4
          %s311 = int_to_ptr.vmem [resolvable:$true] %s310
          %313 = dma.vmem_to_hbm [thread:$0]  %s311, 128, %s308, %s297
        $region40: #{tpu_custom_call.1} parent=31 // pred_fallthru
          _
      $region32: #{tpu_custom_call.1} parent=5 // pred_fallthru
        _
      %p314 = scmp.le.s32.totalorder 2, %s13
      // Predicated region
      $region41: #{tpu_custom_call.1} parent=5 // pred_check
        %p315 = pneg %p314
      $region42: #{tpu_custom_call.1} parent=5 // pred_check_branch
        %317 = sbr.rel (%p315) target = $region44
      $region43: #{tpu_custom_call.1} parent=5 // pred_region
        %s318 = ssub.s32 %s13, 2
        // Predicated region
        $region45: #{tpu_custom_call.1} parent=43 // pred_check
          %p319 = pneg %p110
        $region46: #{tpu_custom_call.1} parent=43 // pred_check_branch
          %321 = sbr.rel (%p319) target = $region48
        $region47: #{tpu_custom_call.1} parent=43 // pred_region
          %s322 = sand.u32 %s95, 1
          %s323 = scalar_lea.sflag [#allocation4], %s322
          %s324 = sand.u32 %s95, 1
          %s325 = smul.addr %s324, 8
          %s326 = scalar_lea.vmem [#allocation5], %s325
          %327 = dma.done %s323, 128
        $region48: #{tpu_custom_call.1} parent=43 // pred_fallthru
          _
      $region44: #{tpu_custom_call.1} parent=5 // pred_fallthru
        _
    $region6: #{tpu_custom_call.1} parent=1 // loop_footer
      %s17 = sadd.s32 1, %s13
    $region7: #{tpu_custom_call.1} parent=1 // loop_footer_branch
      %12 = sbr.rel target = $region3
    $region8: #{tpu_custom_call.1} parent=1 // loop_exit
      _
    %328 = vsyncpa [#allocation3], 1
    %s329 = scalar_lea.sflag [#allocation3], 1
    %330 = vsyncpa %s329, 1
    %331 = vsyncpa [#allocation4], 1
    %s332 = scalar_lea.sflag [#allocation4], 1
    %333 = vsyncpa %s332, 1

</llo_original>
